<compile_context>
chip_gen: v6e
topology: v6e:2x2x1
jax: 0.10.0
libtpu: 0.0.40
codegen_flags: <defaults>
</compile_context>

<pallas_src>
import functools

import jax
import jax.numpy as jnp
from jax.experimental import pallas as pl
from jax.experimental.pallas import tpu as pltpu

_EPS = 1e-9


def _neg_loss_elem(x):
    """Contribution of one negative score x: -log(sigmoid(-x) + 1e-9).

    sigmoid(-x) = 1 / (1 + exp(x)); exp(x)->inf for large x gives sig->0 ->
    log(1e-9), matching the torch module for saturated logits.
    """
    sig = 1.0 / (1.0 + jnp.exp(x))
    return -jnp.log(sig + _EPS)


def _pos_loss_elem(x):
    """Contribution of one positive score x: -log(sigmoid(x) + 1e-9)."""
    sig = 1.0 / (1.0 + jnp.exp(-x))
    return -jnp.log(sig + _EPS)


def _nsl_kernel(neg_ref, out_ref, acc_ref, *, N, TR, T_total, TPC,
                need_mask, has_phantom):
    c = pl.program_id(0)          # core (parallel) index
    t = pl.program_id(1)          # row-tile (arbitrary / reduction) index
    tile_id = c * TPC + t         # logical tile id over the lane-dense slab

    # -- init the per-core accumulator once --
    @pl.when(t == 0)
    def _init():
        acc_ref[...] = jnp.zeros_like(acc_ref)

    def _compute():
        x = neg_ref[...].astype(jnp.float32)                 # (TR, 128) lane-dense
        contrib = _neg_loss_elem(x)
        if need_mask:
            # Keep the select (NOT multiply-by-mask): OOB / padded lanes may be
            # garbage -> NaN through exp/log; where() zeroes them safely.
            row = jax.lax.broadcasted_iota(jnp.int32, x.shape, 0)
            lane = jax.lax.broadcasted_iota(jnp.int32, x.shape, 1)
            idx = (tile_id * TR + row) * 128 + lane          # flat element index
            contrib = jnp.where(idx < N, contrib, 0.0)
        if TR % 8 == 0:
            # Per-vreg partial sums only (VPU adds); no per-step cross-lane reduce.
            acc_ref[...] += contrib.reshape(TR // 8, 8, 128).sum(axis=0)
        else:
            # Small single-tile problems: sublane reduce once, (1, 128) acc.
            acc_ref[...] += jnp.sum(contrib, axis=0, keepdims=True)

    if has_phantom:
        # Phantom tiles (core split remainder): skip all EUP work.  Their DMA is
        # clamped to the last real tile by the index_map and simply discarded.
        pl.when(tile_id < T_total)(_compute)
    else:
        _compute()

    # -- flush this core's partial-sum vreg once, on its last step --
    @pl.when(t == pl.num_programs(1) - 1)
    def _flush():
        out_ref[...] = acc_ref[...].reshape(out_ref.shape)


def _default_num_cores():
    """2 TensorCores on v7x, 1 on v5e/v6e; default 1 if detection fails."""
    try:
        kind = jax.devices()[0].device_kind.lower()
    except Exception:
        return 1
    return 2 if "v7" in kind else 1


def negative_sampling_loss(positive_score, negative_scores, *,
                           block_rows=None, block_bytes=2 * 1024 * 1024,
                           num_cores=None):
    """positive_score: (B,), negative_scores: (B, K) -> scalar f32 loss."""
    B = positive_score.shape[0]
    K = negative_scores.shape[1]
    assert negative_scores.shape[0] == B
    N = B * K

    itemsize = jnp.dtype(negative_scores.dtype).itemsize
    pack = 8 * max(1, 4 // itemsize)     # sublane packing: 8 f32, 16 bf16, 32 int8

    # Lane-dense slab: (R, 128).  Free reshape when N % 128 == 0, else one pad
    # pass (padded values are masked in-kernel, so their content is irrelevant).
    R = -(-N // 128)
    flat = negative_scores.reshape(-1)
    if R * 128 != N:
        flat = jnp.pad(flat, (0, R * 128 - N))
    neg2d = flat.reshape(R, 128)

    # Row-tile size: ~block_bytes per tile (double-buffered by the pipeline ->
    # 2x that in VMEM, well inside the 16/32/32 MiB scoped defaults of
    # v5e/v6e/v7x), rounded to the dtype's sublane packing, or the full slab.
    if block_rows is not None:
        TR = min(int(block_rows), R)
        if TR < R and TR % pack != 0:
            TR = min(R, max(pack, (TR // pack) * pack))
    else:
        target_rows = max(pack, block_bytes // (128 * itemsize))
        TR = R if R <= target_rows else (target_rows // pack) * pack
    T_total = -(-R // TR)                     # number of real row tiles

    if num_cores is None:
        num_cores = _default_num_cores()
    NCORES = max(1, min(int(num_cores), T_total))
    TPC = -(-T_total // NCORES)               # row tiles per core

    AR = 8 if TR % 8 == 0 else 1              # accumulator rows
    need_mask = (T_total * TR * 128 != N)     # padding or OOB rows exist
    has_phantom = (NCORES * TPC != T_total)   # core-split remainder tiles exist

    kernel = functools.partial(
        _nsl_kernel, N=N, TR=TR, T_total=T_total, TPC=TPC,
        need_mask=need_mask, has_phantom=has_phantom)

    cost = pl.CostEstimate(
        flops=6 * N,
        transcendentals=2 * N,
        bytes_accessed=int(N * itemsize + NCORES * AR * 128 * 4),
    )

    partials = pl.pallas_call(
        kernel,
        out_shape=jax.ShapeDtypeStruct((NCORES, AR, 128), jnp.float32),
        grid_spec=pltpu.PrefetchScalarGridSpec(
            num_scalar_prefetch=0,
            grid=(NCORES, TPC),
            in_specs=[
                # Lane-dense negative row tiles; phantom tiles clamp to the last
                # real tile (their compute is pl.when-gated off in the kernel).
                pl.BlockSpec(
                    (TR, 128),
                    lambda c, t: (jnp.minimum(c * TPC + t, T_total - 1), 0),
                ),
            ],
            out_specs=pl.BlockSpec((1, AR, 128), lambda c, t: (c, 0, 0)),
            scratch_shapes=[pltpu.VMEM((AR, 128), jnp.float32)],
        ),
        compiler_params=pltpu.CompilerParams(
            dimension_semantics=("parallel", "arbitrary"),
        ),
        cost_estimate=cost,
    )(neg2d)

    # Tiny positive-loss term (B elements) + final mean in plain XLA (per review).
    pos_sum = jnp.sum(_pos_loss_elem(positive_score.astype(jnp.float32)))
    return (jnp.sum(partials) + pos_sum) / B


def _reference(positive_score, negative_scores):
    eps = 1e-9
    pos_loss = -jnp.log(jax.nn.sigmoid(positive_score) + eps)
    neg_loss = -jnp.sum(jnp.log(jax.nn.sigmoid(-negative_scores) + eps), axis=1)
    return jnp.mean(pos_loss + neg_loss)


if __name__ == "__main__":
    key = jax.random.PRNGKey(0)
    ks = jax.random.split(key, 6)

    # Case 1: module-scale toy shapes; B*K = 128 -> free lane-dense reshape,
    # single tile, no mask.
    B1, K1 = 8, 16
    pos1 = jax.random.normal(ks[0], (B1,), dtype=jnp.float32)
    neg1 = jax.random.normal(ks[1], (B1, K1), dtype=jnp.float32)
    out1 = negative_sampling_loss(pos1, neg1)
    jax.block_until_ready(out1)
    ref1 = _reference(pos1, neg1)
    assert jnp.allclose(out1, ref1, rtol=1e-5, atol=1e-5), (out1, ref1)

    # Case 2: B*K % 128 != 0 -> padded tail + in-kernel flat-index mask,
    # small-tile (AR=1) accumulate path.
    B2, K2 = 50, 24
    pos2 = jax.random.normal(ks[2], (B2,), dtype=jnp.float32)
    neg2 = jax.random.normal(ks[3], (B2, K2), dtype=jnp.float32)
    out2 = negative_sampling_loss(pos2, neg2)
    jax.block_until_ready(out2)
    ref2 = _reference(pos2, neg2)
    assert jnp.allclose(out2, ref2, rtol=1e-5, atol=1e-5), (out2, ref2)

    # Case 3: forced multi-tile reduction with a 2-way core split (one phantom
    # tile exercised via pl.when gating); the parallel axis is just a serial
    # loop level on single-TC chips, so this is correct everywhere.
    B3, K3 = 96, 32
    pos3 = jax.random.normal(ks[4], (B3,), dtype=jnp.float32)
    neg3 = jax.random.normal(ks[5], (B3, K3), dtype=jnp.float32)
    out3 = negative_sampling_loss(pos3, neg3, block_rows=8, num_cores=2)
    jax.block_until_ready(out3)
    ref3 = _reference(pos3, neg3)
    assert jnp.allclose(out3, ref3, rtol=1e-5, atol=1e-5), (out3, ref3)

    print("KERNEL_OK")
</pallas_src>

<mosaic_0001>
module attributes {stable_mosaic.version = 11 : i64} {
  func.func @_nsl_kernel(%arg0: i32, %arg1: i32, %arg2: memref<1x128xf32, #tpu.memory_space<vmem>>, %arg3: memref<1x1x128xf32, #tpu.memory_space<vmem>>, %arg4: memref<1x128xf32, #tpu.memory_space<vmem>>) attributes {dimension_semantics = [#tpu.dimension_semantics<parallel>, #tpu.dimension_semantics<arbitrary>], iteration_bounds = array<i64: 1, 1>, scalar_prefetch = 0 : i64, scratch_operands = 1 : i64, tpu.core_type = #tpu.core_type<tc>, window_params = [{transform_indices = @transform_0, window_bounds = array<i64: 1, 128>}, {transform_indices = @transform_1, window_bounds = array<i64: 1, 1, 128>}]} {
    %c0_i32 = arith.constant 0 : i32
    %0 = arith.cmpi eq, %arg1, %c0_i32 : i32
    %1 = arith.extui %0 : i1 to i32
    %c0_i32_0 = arith.constant 0 : i32
    %2 = arith.cmpi ne, %1, %c0_i32_0 : i32
    scf.if %2 {
      %cst_12 = arith.constant 0.000000e+00 : f32
      %22 = vector.broadcast %cst_12 : f32 to vector<1x128xf32>
      %c0_13 = arith.constant 0 : index
      %c0_14 = arith.constant 0 : index
      %23 = vector.load %arg4[%c0_13, %c0_14] : memref<1x128xf32, #tpu.memory_space<vmem>>, vector<1x128xf32>
      tpu.vector_store %arg4[%c0_13, %c0_14], %22 {strides = array<i32>} : memref<1x128xf32, #tpu.memory_space<vmem>>, vector<1x128xf32>,
    } else {
    }
    %c0 = arith.constant 0 : index
    %c0_1 = arith.constant 0 : index
    %3 = vector.load %arg2[%c0, %c0_1] : memref<1x128xf32, #tpu.memory_space<vmem>>, vector<1x128xf32>
    %4 = math.exp %3 : vector<1x128xf32>
    %cst = arith.constant 1.000000e+00 : f32
    %5 = vector.broadcast %cst : f32 to vector<1x128xf32>
    %6 = arith.addf %5, %4 : vector<1x128xf32>
    %cst_2 = arith.constant 1.000000e+00 : f32
    %7 = vector.broadcast %cst_2 : f32 to vector<1x128xf32>
    %8 = arith.divf %7, %6 : vector<1x128xf32>
    %cst_3 = arith.constant 9.99999971E-10 : f32
    %9 = vector.broadcast %cst_3 : f32 to vector<1x128xf32>
    %10 = arith.addf %8, %9 : vector<1x128xf32>
    %11 = math.log %10 : vector<1x128xf32>
    %cst_4 = arith.constant 0.000000e+00 : f32
    %12 = vector.broadcast %cst_4 : f32 to vector<1x128xf32>
    %13 = arith.subf %12, %11 : vector<1x128xf32>
    %c0_5 = arith.constant 0 : index
    %c0_6 = arith.constant 0 : index
    %14 = vector.load %arg4[%c0_5, %c0_6] : memref<1x128xf32, #tpu.memory_space<vmem>>, vector<1x128xf32>
    %cst_7 = arith.constant dense<0.000000e+00> : vector<128xf32>
    %15 = vector.multi_reduction <add>, %13, %cst_7 [0] : vector<1x128xf32> to vector<128xf32>
    %16 = vector.shape_cast %15 : vector<128xf32> to vector<1x128xf32>
    %17 = arith.addf %14, %16 : vector<1x128xf32>
    %c0_8 = arith.constant 0 : index
    %c0_9 = arith.constant 0 : index
    %18 = vector.load %arg4[%c0_8, %c0_9] : memref<1x128xf32, #tpu.memory_space<vmem>>, vector<1x128xf32>
    tpu.vector_store %arg4[%c0_8, %c0_9], %17 {strides = array<i32>} : memref<1x128xf32, #tpu.memory_space<vmem>>, vector<1x128xf32>,
    %c0_i32_10 = arith.constant 0 : i32
    %19 = arith.cmpi eq, %arg1, %c0_i32_10 : i32
    %20 = arith.extui %19 : i1 to i32
    %c0_i32_11 = arith.constant 0 : i32
    %21 = arith.cmpi ne, %20, %c0_i32_11 : i32
    scf.if %21 {
      %c0_12 = arith.constant 0 : index
      %c0_13 = arith.constant 0 : index
      %22 = vector.load %arg4[%c0_12, %c0_13] : memref<1x128xf32, #tpu.memory_space<vmem>>, vector<1x128xf32>
      %23 = vector.shape_cast %22 : vector<1x128xf32> to vector<1x1x128xf32>
      %c0_14 = arith.constant 0 : index
      %c0_15 = arith.constant 0 : index
      %c0_16 = arith.constant 0 : index
      %24 = vector.load %arg3[%c0_14, %c0_15, %c0_16] : memref<1x1x128xf32, #tpu.memory_space<vmem>>, vector<1x1x128xf32>
      tpu.vector_store %arg3[%c0_14, %c0_15, %c0_16], %23 {strides = array<i32>} : memref<1x1x128xf32, #tpu.memory_space<vmem>>, vector<1x1x128xf32>,
    } else {
    }
    return
  }
  func.func @transform_0(%arg0: i32, %arg1: i32) -> (i32, i32) {
    %c1_i32 = arith.constant 1 : i32
    %0 = arith.muli %arg0, %c1_i32 : i32
    %1 = arith.addi %0, %arg1 : i32
    %c0_i32 = arith.constant 0 : i32
    %2 = arith.minsi %1, %c0_i32 : i32
    %c0_i32_0 = arith.constant 0 : i32
    %c0_i32_1 = arith.constant 0 : i32
    return %2, %c0_i32_0 : i32, i32
  }
  func.func @transform_1(%arg0: i32, %arg1: i32) -> (i32, i32, i32) {
    %c0_i32 = arith.constant 0 : i32
    %c0_i32_0 = arith.constant 0 : i32
    %c0_i32_1 = arith.constant 0 : i32
    return %arg0, %c0_i32, %c0_i32_0 : i32, i32, i32
  }
}

</mosaic_0001>

<llo_original>
// kernel: tpu_custom_call.1
$region0: #{tpu_custom_call.1}
  #allocation0 [shape = 'u32[]', space=smem, size = 0x4, offset = 0x4, fixed_abs, tag = 'smem constant byte address 0x4 - core index']
  #allocation1 [shape = 'u32[144,128]{1,0:T(1,128)}', space=vmem, size = 0x12000, scoped, tag = 'internal scratch']
  #allocation2 [shape = 'f32[1,128]{1,0:T(1,128)}', space=vmem, size = 0x200, scoped, tag = 'scratch operand']
  %s0 = inlined_call_operand.hbm [shape: f32[1,128], index: 0, kind: input, shape index: {}]
  %s1 = inlined_call_operand.hbm [shape: f32[1,1,128], index: 1, kind: output, shape index: {}]
  %s2 = sld [smem:[#allocation0]]
  $region26: #{tpu_custom_call.1} parent=0
    _
  %s4 = ssub.s32 1, %s2
  %s5 = scalar_select 0, %s4, %s2
  $region1: #{tpu_custom_call.1} parent=0
    #allocation3 [shape = 'u8[512]{0}', space=vmem, size = 0x400, scoped, tag = 'input window, operand 0, single buffered']
    #allocation4 [shape = 's32[1]{0}', space=sflag, size = 0x4, scoped, tag = 'scoped memory for tpu_custom_call.1']
    #allocation5 [shape = 's32[1]{0}', space=sflag, size = 0x4, scoped, tag = 'scoped memory for tpu_custom_call.1']
    #allocation6 [shape = 'u8[512]{0}', space=vmem, size = 0x400, scoped, tag = 'output window, operand 0, single buffered']
    %6 = vsyncpa [#allocation4], 0
    %7 = vsyncpa [#allocation5], 0
    // Predicated region
    $region2: #{tpu_custom_call.1} parent=1 // pred_check
      _
    $region3: #{tpu_custom_call.1} parent=1 // pred_check_branch
      %9 = sbr.rel (0) target = $region5
    $region4: #{tpu_custom_call.1} parent=1 // pred_region
      %s10 = sadd.s32 0, 0
      %p11 = scmp.lt.s32.totalorder %s10, 0
      %s12 = scalar_select %p11, %s10, 0
      %s14 = ssub.s32 16, 16
      %15 = vsyncadd [#allocation4], %s14
      %s16 = smul.addr %s12, 16
      %s17 = scalar_lea.hbm %s0, %s16
      %s19 = sshll.u32 [#allocation3], 4
      %s20 = int_to_ptr.vmem [resolvable:$true] %s19
      %22 = dma.hbm_to_vmem [thread:$0]  %s17, 16, %s20, [#allocation4]
    $region5: #{tpu_custom_call.1} parent=1 // pred_fallthru
      _
    // Predicated region
    $region6: #{tpu_custom_call.1} parent=1 // pred_check
      _
    $region7: #{tpu_custom_call.1} parent=1 // pred_check_branch
      %24 = sbr.rel (0) target = $region9
    $region8: #{tpu_custom_call.1} parent=1 // pred_region
      %25 = dma.done [#allocation4], 16
    $region9: #{tpu_custom_call.1} parent=1 // pred_fallthru
      _
    %s26 = sadd.s32 0, 0
    %p27 = scmp.lt.s32.totalorder %s26, 0
    %s28 = scalar_select %p27, %s26, 0
    %p29 = scmp.eq.s32.totalorder 0, 0
    // Predicated region
    $region10: #{tpu_custom_call.1} parent=1 // pred_check
      %p30 = pneg %p29
    $region11: #{tpu_custom_call.1} parent=1 // pred_check_branch
      %32 = sbr.rel (%p30) target = $region13
    $region12: #{tpu_custom_call.1} parent=1 // pred_region
      %33 = vst [vmem:[#allocation2] sm:$0x1] 0.0
    $region13: #{tpu_custom_call.1} parent=1 // pred_fallthru
      _
    %v34 = vld [vmem:[#allocation3] sm:$0x1]
    %v35 = vmul.f32 %v34, 1.442695
    %v36 = vpow.pop %v35
    %v37 = vadd.f32 %v36, 1.0
    %v38 = vrcp.pop %v37
    %v39 = vmul.f32 1.0, %v38
    %v40 = vadd.f32 %v39, 1e-09
    %v41 = vlog2.pop %v40
    %v42 = vmul.f32 %v41, 0.6931472
    %v43 = vsub.f32 0.0, %v42
    %v44 = vld [vmem:[#allocation2] sm:$0x1]
    %v45 = vadd.f32 %v43, 0.0
    %v46 = vadd.f32 %v44, %v45
    %47 = vst [vmem:[#allocation2] sm:$0x1] %v46
    // Predicated region
    $region14: #{tpu_custom_call.1} parent=1 // pred_check
      %p48 = pneg %p29
    $region15: #{tpu_custom_call.1} parent=1 // pred_check_branch
      %50 = sbr.rel (%p48) target = $region17
    $region16: #{tpu_custom_call.1} parent=1 // pred_region
      %v51 = vld [vmem:[#allocation2] sm:$0x1]
      %52 = vst [vmem:[#allocation6] sm:$0x1] %v51
    $region17: #{tpu_custom_call.1} parent=1 // pred_fallthru
      _
    // Predicated region
    $region18: #{tpu_custom_call.1} parent=1 // pred_check
      _
    $region19: #{tpu_custom_call.1} parent=1 // pred_check_branch
      %54 = sbr.rel (0) target = $region21
    $region20: #{tpu_custom_call.1} parent=1 // pred_region
      %s56 = ssub.s32 16, 16
      %57 = vsyncadd [#allocation5], %s56
      %s59 = sshll.u32 [#allocation6], 4
      %s60 = int_to_ptr.vmem [resolvable:$true] %s59
      %62 = dma.vmem_to_hbm [thread:$0]  %s60, 16, %s1, [#allocation5]
    $region21: #{tpu_custom_call.1} parent=1 // pred_fallthru
      _
    // Predicated region
    $region22: #{tpu_custom_call.1} parent=1 // pred_check
      _
    $region23: #{tpu_custom_call.1} parent=1 // pred_check_branch
      %64 = sbr.rel (0) target = $region25
    $region24: #{tpu_custom_call.1} parent=1 // pred_region
      %65 = dma.done [#allocation5], 16
    $region25: #{tpu_custom_call.1} parent=1 // pred_fallthru
      _
    %66 = vsyncpa [#allocation4], 1
    %67 = vsyncpa [#allocation5], 1

</llo_original>
